<compile_context>
chip_gen: v7x
topology: tpu7x:2x2x1
jax: 0.10.0
libtpu: 0.0.40
codegen_flags: <defaults>
</compile_context>

<pallas_src>
import functools

import jax
import jax.numpy as jnp
from jax.experimental import pallas as pl
from jax.experimental.pallas import tpu as pltpu


def _round_up(x, m):
    return ((x + m - 1) // m) * m


def _ce_kernel(truth_ref, scores_ref, out_ref, m_ref, l_ref, t_ref,
               *, n_rows, n_cols, tile_n, tile_c):
    i = pl.program_id(0)            # row-block index   ('parallel')
    j = pl.program_id(1)            # class-block index ('arbitrary', innermost)
    nj = pl.num_programs(1)

    @pl.when(j == 0)
    def _():
        m_ref[...] = jnp.full_like(m_ref, -jnp.inf)   # running row max
        l_ref[...] = jnp.zeros_like(l_ref)            # running exp-sum
        t_ref[...] = jnp.zeros_like(t_ref)            # running target score

    s = scores_ref[...].astype(jnp.float32)           # (tile_n, tile_c), in-kernel upcast
    tgt = truth_ref[...]                              # (tile_n, 1) int32

    neg_inf = jnp.float32(-jnp.inf)

    # Global class indices covered by this tile; mask padded columns.
    col = jax.lax.broadcasted_iota(jnp.int32, s.shape, 1) + j * tile_c
    col_ok = col < n_cols
    s_m = jnp.where(col_ok, s, neg_inf)

    # Online logsumexp update.
    m_prev = m_ref[...]                               # (tile_n, 1)
    m_blk = jnp.max(s_m, axis=-1, keepdims=True)
    m_new = jnp.maximum(m_prev, m_blk)
    # Guard against exp(-inf - -inf) = nan on the very first update.
    scale = jnp.where(m_prev == neg_inf,
                      jnp.zeros_like(m_prev),
                      jnp.exp(m_prev - m_new))
    p = jnp.exp(s_m - m_new)                          # padded cols -> exp(-inf) = 0
    l_ref[...] = scale * l_ref[...] + jnp.sum(p, axis=-1, keepdims=True)
    m_ref[...] = m_new

    # Gather scores[i, truth[i]] via one-hot compare (no dynamic gather on TPU).
    hit = (col == tgt) & col_ok
    t_ref[...] = t_ref[...] + jnp.sum(jnp.where(hit, s, jnp.zeros_like(s)),
                                      axis=-1, keepdims=True)

    # Finalize on the last class tile: per-row NLL, mask padded rows, emit the
    # per-row-block partial sum as a lane-dense output block.
    @pl.when(j == nj - 1)
    def _():
        per_row = m_ref[...] + jnp.log(l_ref[...]) - t_ref[...]   # (tile_n, 1)
        row = jax.lax.broadcasted_iota(jnp.int32, per_row.shape, 0) + i * tile_n
        per_row = jnp.where(row < n_rows, per_row, jnp.zeros_like(per_row))
        partial = jnp.sum(per_row)
        out_ref[...] = jnp.full(out_ref.shape, partial, dtype=out_ref.dtype)


def crossentropy_loss_allneg(truth, scores, *, tile_n=256, tile_c=2048):
    """truth: (N,) or (N,1) integer class ids; scores: (N, C) float logits."""
    n, c = scores.shape
    truth2d = truth.reshape(n, 1).astype(jnp.int32)   # == truth.view(N) semantics

    # Clamp tiles: full-dim blocks are always legal; sub-dim blocks must be
    # multiples of (8, 128).
    tile_n = n if tile_n >= n else _round_up(tile_n, 8)
    tile_c = c if tile_c >= c else _round_up(tile_c, 128)

    grid_i = pl.cdiv(n, tile_n)
    grid_j = pl.cdiv(c, tile_c)

    kernel = functools.partial(_ce_kernel, n_rows=n, n_cols=c,
                               tile_n=tile_n, tile_c=tile_c)

    partials = pl.pallas_call(
        kernel,
        out_shape=jax.ShapeDtypeStruct((grid_i, 8, 128), jnp.float32),
        grid_spec=pltpu.PrefetchScalarGridSpec(
            num_scalar_prefetch=0,
            grid=(grid_i, grid_j),
            in_specs=[
                pl.BlockSpec((tile_n, 1), lambda i, j: (i, 0)),       # truth (resident over j)
                pl.BlockSpec((tile_n, tile_c), lambda i, j: (i, j)),  # scores (native dtype)
            ],
            out_specs=pl.BlockSpec((1, 8, 128), lambda i, j: (i, 0, 0)),
            scratch_shapes=[
                pltpu.VMEM((tile_n, 1), jnp.float32),   # running max m
                pltpu.VMEM((tile_n, 1), jnp.float32),   # running exp-sum l
                pltpu.VMEM((tile_n, 1), jnp.float32),   # target-score accumulator
            ],
        ),
        compiler_params=pltpu.CompilerParams(
            dimension_semantics=("parallel", "arbitrary"),
            vmem_limit_bytes=32 * 1024 * 1024,
        ),
    )(truth2d, scores)

    # Final reduction in plain JAX (keeps the row axis 'parallel' for v7x's 2 TCs).
    return jnp.sum(partials[:, 0, 0]) / jnp.float32(n)


if __name__ == "__main__":
    key = jax.random.PRNGKey(0)
    k_scores, k_truth = jax.random.split(key)

    # Small shapes that exercise both row padding (20 % 8 != 0 at tile_n=8)
    # and class padding (320 % 128 != 0 at tile_c=128) plus the 2-D grid.
    N, C = 20, 320
    scores = jax.random.normal(k_scores, (N, C), dtype=jnp.float32)
    truth = jax.random.randint(k_truth, (N,), 0, C, dtype=jnp.int32)

    # Tiled f32 path.
    loss = crossentropy_loss_allneg(truth, scores, tile_n=8, tile_c=128)
    loss = jax.block_until_ready(loss)

    lse = jax.nn.logsumexp(scores, axis=-1)
    ref = jnp.mean(lse - scores[jnp.arange(N), truth])
    assert jnp.allclose(loss, ref, atol=1e-5, rtol=1e-5), (loss, ref)

    # Native bf16 path (single-block grid, in-kernel upcast only).
    scores_bf16 = scores.astype(jnp.bfloat16)
    loss_bf = jax.block_until_ready(crossentropy_loss_allneg(truth, scores_bf16))
    s32 = scores_bf16.astype(jnp.float32)
    ref_bf = jnp.mean(jax.nn.logsumexp(s32, axis=-1) - s32[jnp.arange(N), truth])
    assert jnp.allclose(loss_bf, ref_bf, atol=1e-4, rtol=1e-4), (loss_bf, ref_bf)

    print("KERNEL_OK")
</pallas_src>

<mosaic_0001>
module attributes {stable_mosaic.version = 11 : i64} {
  func.func @_ce_kernel(%arg0: i32, %arg1: i32, %arg2: memref<8x1xi32, #tpu.memory_space<vmem>>, %arg3: memref<8x128xf32, #tpu.memory_space<vmem>>, %arg4: memref<1x8x128xf32, #tpu.memory_space<vmem>>, %arg5: memref<8x1xf32, #tpu.memory_space<vmem>>, %arg6: memref<8x1xf32, #tpu.memory_space<vmem>>, %arg7: memref<8x1xf32, #tpu.memory_space<vmem>>) attributes {dimension_semantics = [#tpu.dimension_semantics<parallel>, #tpu.dimension_semantics<arbitrary>], iteration_bounds = array<i64: 3, 3>, scalar_prefetch = 0 : i64, scratch_operands = 3 : i64, tpu.core_type = #tpu.core_type<tc>, window_params = [{transform_indices = @transform_0, window_bounds = array<i64: 8, 1>}, {transform_indices = @transform_1, window_bounds = array<i64: 8, 128>}, {transform_indices = @transform_2, window_bounds = array<i64: 1, 8, 128>}]} {
    %c0_i32 = arith.constant 0 : i32
    %0 = arith.cmpi eq, %arg1, %c0_i32 : i32
    %1 = arith.extui %0 : i1 to i32
    %c0_i32_0 = arith.constant 0 : i32
    %2 = arith.cmpi ne, %1, %c0_i32_0 : i32
    scf.if %2 {
      %cst_23 = arith.constant 0xFF800000 : f32
      %46 = vector.broadcast %cst_23 : f32 to vector<8x1xf32>
      %c0_24 = arith.constant 0 : index
      %c0_25 = arith.constant 0 : index
      %47 = vector.load %arg5[%c0_24, %c0_25] : memref<8x1xf32, #tpu.memory_space<vmem>>, vector<8x1xf32>
      tpu.vector_store %arg5[%c0_24, %c0_25], %46 {strides = array<i32>} : memref<8x1xf32, #tpu.memory_space<vmem>>, vector<8x1xf32>,
      %cst_26 = arith.constant 0.000000e+00 : f32
      %48 = vector.broadcast %cst_26 : f32 to vector<8x1xf32>
      %c0_27 = arith.constant 0 : index
      %c0_28 = arith.constant 0 : index
      %49 = vector.load %arg6[%c0_27, %c0_28] : memref<8x1xf32, #tpu.memory_space<vmem>>, vector<8x1xf32>
      tpu.vector_store %arg6[%c0_27, %c0_28], %48 {strides = array<i32>} : memref<8x1xf32, #tpu.memory_space<vmem>>, vector<8x1xf32>,
      %cst_29 = arith.constant 0.000000e+00 : f32
      %50 = vector.broadcast %cst_29 : f32 to vector<8x1xf32>
      %c0_30 = arith.constant 0 : index
      %c0_31 = arith.constant 0 : index
      %51 = vector.load %arg7[%c0_30, %c0_31] : memref<8x1xf32, #tpu.memory_space<vmem>>, vector<8x1xf32>
      tpu.vector_store %arg7[%c0_30, %c0_31], %50 {strides = array<i32>} : memref<8x1xf32, #tpu.memory_space<vmem>>, vector<8x1xf32>,
    } else {
    }
    %c0 = arith.constant 0 : index
    %c0_1 = arith.constant 0 : index
    %3 = vector.load %arg3[%c0, %c0_1] : memref<8x128xf32, #tpu.memory_space<vmem>>, vector<8x128xf32>
    %c0_2 = arith.constant 0 : index
    %c0_3 = arith.constant 0 : index
    %4 = vector.load %arg2[%c0_2, %c0_3] : memref<8x1xi32, #tpu.memory_space<vmem>>, vector<8x1xi32>
    %5 = tpu.iota {dimensions = array<i32: 1>} : vector<8x128xi32>
    %c128_i32 = arith.constant 128 : i32
    %6 = arith.muli %arg1, %c128_i32 : i32
    %7 = vector.broadcast %6 : i32 to vector<8x128xi32>
    %8 = arith.addi %5, %7 : vector<8x128xi32>
    %c320_i32 = arith.constant 320 : i32
    %9 = vector.broadcast %c320_i32 : i32 to vector<8x128xi32>
    %10 = arith.cmpi slt, %8, %9 : vector<8x128xi32>
    %cst = arith.constant 0xFF800000 : f32
    %11 = vector.broadcast %cst : f32 to vector<8x128xf32>
    %12 = arith.select %10, %3, %11 : vector<8x128xi1>, vector<8x128xf32>
    %c0_4 = arith.constant 0 : index
    %c0_5 = arith.constant 0 : index
    %13 = vector.load %arg5[%c0_4, %c0_5] : memref<8x1xf32, #tpu.memory_space<vmem>>, vector<8x1xf32>
    %cst_6 = arith.constant dense<0xFF800000> : vector<8xf32>
    %14 = vector.multi_reduction <maximumf>, %12, %cst_6 [1] : vector<8x128xf32> to vector<8xf32>
    %15 = vector.shape_cast %14 : vector<8xf32> to vector<8x1xf32>
    %16 = arith.maximumf %13, %15 : vector<8x1xf32>
    %cst_7 = arith.constant 0xFF800000 : f32
    %17 = vector.broadcast %cst_7 : f32 to vector<8x1xf32>
    %18 = arith.cmpf oeq, %13, %17 : vector<8x1xf32>
    %cst_8 = arith.constant 0.000000e+00 : f32
    %19 = vector.broadcast %cst_8 : f32 to vector<8x1xf32>
    %20 = arith.subf %13, %16 : vector<8x1xf32>
    %21 = math.exp %20 : vector<8x1xf32>
    %22 = arith.select %18, %19, %21 : vector<8x1xi1>, vector<8x1xf32>
    %23 = vector.broadcast %16 : vector<8x1xf32> to vector<8x128xf32>
    %24 = arith.subf %12, %23 : vector<8x128xf32>
    %25 = math.exp %24 : vector<8x128xf32>
    %c0_9 = arith.constant 0 : index
    %c0_10 = arith.constant 0 : index
    %26 = vector.load %arg6[%c0_9, %c0_10] : memref<8x1xf32, #tpu.memory_space<vmem>>, vector<8x1xf32>
    %27 = arith.mulf %22, %26 : vector<8x1xf32>
    %cst_11 = arith.constant dense<0.000000e+00> : vector<8xf32>
    %28 = vector.multi_reduction <add>, %25, %cst_11 [1] : vector<8x128xf32> to vector<8xf32>
    %29 = vector.shape_cast %28 : vector<8xf32> to vector<8x1xf32>
    %30 = arith.addf %27, %29 : vector<8x1xf32>
    %c0_12 = arith.constant 0 : index
    %c0_13 = arith.constant 0 : index
    %31 = vector.load %arg6[%c0_12, %c0_13] : memref<8x1xf32, #tpu.memory_space<vmem>>, vector<8x1xf32>
    tpu.vector_store %arg6[%c0_12, %c0_13], %30 {strides = array<i32>} : memref<8x1xf32, #tpu.memory_space<vmem>>, vector<8x1xf32>,
    %c0_14 = arith.constant 0 : index
    %c0_15 = arith.constant 0 : index
    %32 = vector.load %arg5[%c0_14, %c0_15] : memref<8x1xf32, #tpu.memory_space<vmem>>, vector<8x1xf32>
    tpu.vector_store %arg5[%c0_14, %c0_15], %16 {strides = array<i32>} : memref<8x1xf32, #tpu.memory_space<vmem>>, vector<8x1xf32>,
    %33 = vector.broadcast %4 : vector<8x1xi32> to vector<8x128xi32>
    %34 = arith.cmpi eq, %8, %33 : vector<8x128xi32>
    %35 = arith.andi %34, %10 : vector<8x128xi1>
    %c0_16 = arith.constant 0 : index
    %c0_17 = arith.constant 0 : index
    %36 = vector.load %arg7[%c0_16, %c0_17] : memref<8x1xf32, #tpu.memory_space<vmem>>, vector<8x1xf32>
    %cst_18 = arith.constant 0.000000e+00 : f32
    %37 = vector.broadcast %cst_18 : f32 to vector<8x128xf32>
    %38 = arith.select %35, %3, %37 : vector<8x128xi1>, vector<8x128xf32>
    %cst_19 = arith.constant dense<0.000000e+00> : vector<8xf32>
    %39 = vector.multi_reduction <add>, %38, %cst_19 [1] : vector<8x128xf32> to vector<8xf32>
    %40 = vector.shape_cast %39 : vector<8xf32> to vector<8x1xf32>
    %41 = arith.addf %36, %40 : vector<8x1xf32>
    %c0_20 = arith.constant 0 : index
    %c0_21 = arith.constant 0 : index
    %42 = vector.load %arg7[%c0_20, %c0_21] : memref<8x1xf32, #tpu.memory_space<vmem>>, vector<8x1xf32>
    tpu.vector_store %arg7[%c0_20, %c0_21], %41 {strides = array<i32>} : memref<8x1xf32, #tpu.memory_space<vmem>>, vector<8x1xf32>,
    %c2_i32 = arith.constant 2 : i32
    %43 = arith.cmpi eq, %arg1, %c2_i32 : i32
    %44 = arith.extui %43 : i1 to i32
    %c0_i32_22 = arith.constant 0 : i32
    %45 = arith.cmpi ne, %44, %c0_i32_22 : i32
    scf.if %45 {
      %c0_23 = arith.constant 0 : index
      %c0_24 = arith.constant 0 : index
      %46 = vector.load %arg5[%c0_23, %c0_24] : memref<8x1xf32, #tpu.memory_space<vmem>>, vector<8x1xf32>
      %c0_25 = arith.constant 0 : index
      %c0_26 = arith.constant 0 : index
      %47 = vector.load %arg6[%c0_25, %c0_26] : memref<8x1xf32, #tpu.memory_space<vmem>>, vector<8x1xf32>
      %48 = math.log %47 : vector<8x1xf32>
      %49 = arith.addf %46, %48 : vector<8x1xf32>
      %c0_27 = arith.constant 0 : index
      %c0_28 = arith.constant 0 : index
      %50 = vector.load %arg7[%c0_27, %c0_28] : memref<8x1xf32, #tpu.memory_space<vmem>>, vector<8x1xf32>
      %51 = arith.subf %49, %50 : vector<8x1xf32>
      %52 = tpu.iota {dimensions = array<i32: 0>} : vector<8x1xi32>
      %c8_i32 = arith.constant 8 : i32
      %53 = arith.muli %arg0, %c8_i32 : i32
      %54 = vector.broadcast %53 : i32 to vector<8x1xi32>
      %55 = arith.addi %52, %54 : vector<8x1xi32>
      %c20_i32 = arith.constant 20 : i32
      %56 = vector.broadcast %c20_i32 : i32 to vector<8x1xi32>
      %57 = arith.cmpi slt, %55, %56 : vector<8x1xi32>
      %cst_29 = arith.constant 0.000000e+00 : f32
      %58 = vector.broadcast %cst_29 : f32 to vector<8x1xf32>
      %59 = arith.select %57, %51, %58 : vector<8x1xi1>, vector<8x1xf32>
      %60 = vector.shape_cast %59 : vector<8x1xf32> to vector<1x8x1xf32>
      %cst_30 = arith.constant dense<0.000000e+00> : vector<1xf32>
      %61 = vector.multi_reduction <add>, %60, %cst_30 [1, 2] : vector<1x8x1xf32> to vector<1xf32>
      %62 = vector.shape_cast %61 : vector<1xf32> to vector<1x1x1xf32>
      %63 = vector.extract %62[0, 0, 0] : f32 from vector<1x1x1xf32>
      %64 = vector.broadcast %63 : f32 to vector<1x8x128xf32>
      %c0_31 = arith.constant 0 : index
      %c0_32 = arith.constant 0 : index
      %c0_33 = arith.constant 0 : index
      %65 = vector.load %arg4[%c0_31, %c0_32, %c0_33] : memref<1x8x128xf32, #tpu.memory_space<vmem>>, vector<1x8x128xf32>
      tpu.vector_store %arg4[%c0_31, %c0_32, %c0_33], %64 {strides = array<i32>} : memref<1x8x128xf32, #tpu.memory_space<vmem>>, vector<1x8x128xf32>,
    } else {
    }
    return
  }
  func.func @transform_0(%arg0: i32, %arg1: i32) -> (i32, i32) {
    %c0_i32 = arith.constant 0 : i32
    %c0_i32_0 = arith.constant 0 : i32
    return %arg0, %c0_i32 : i32, i32
  }
  func.func @transform_1(%arg0: i32, %arg1: i32) -> (i32, i32) {
    %c0_i32 = arith.constant 0 : i32
    return %arg0, %arg1 : i32, i32
  }
  func.func @transform_2(%arg0: i32, %arg1: i32) -> (i32, i32, i32) {
    %c0_i32 = arith.constant 0 : i32
    %c0_i32_0 = arith.constant 0 : i32
    %c0_i32_1 = arith.constant 0 : i32
    return %arg0, %c0_i32, %c0_i32_0 : i32, i32, i32
  }
}

</mosaic_0001>

<llo_original>
// kernel: tpu_custom_call.1
$region0: #{tpu_custom_call.1}
  #allocation0 [shape = 'u32[]', space=smem, size = 0x4, offset = 0x4, fixed_abs, tag = 'smem constant byte address 0x4 - core index']
  #allocation1 [shape = 'u32[144,128]{1,0:T(1,128)}', space=vmem, size = 0x12000, scoped, tag = 'internal scratch']
  #allocation2 [shape = 'f32[8,1]{1,0:T(8,128)}', space=vmem, size = 0x1000, scoped, tag = 'scratch operand']
  #allocation3 [shape = 'f32[8,1]{1,0:T(8,128)}', space=vmem, size = 0x1000, scoped, tag = 'scratch operand']
  #allocation4 [shape = 'f32[8,1]{1,0:T(8,128)}', space=vmem, size = 0x1000, scoped, tag = 'scratch operand']
  %s0 = inlined_call_operand.vmem [shape: s32[20,1], index: 0, kind: input, shape index: {}]
  %s1 = inlined_call_operand.hbm [shape: f32[20,320], index: 1, kind: input, shape index: {}]
  %s2 = inlined_call_operand.hbm [shape: f32[3,8,128], index: 2, kind: output, shape index: {}]
  %s3 = sld [smem:[#allocation0]]
  $region53: #{tpu_custom_call.1} parent=0
    _
  %s5 = ssub.s32 1, %s3
  %s6 = scalar_select 0, %s5, %s3
  $region1: #{tpu_custom_call.1} parent=0
    #allocation5 [shape = 'u8[8192]{0}', space=vmem, size = 0x2000, scoped, tag = 'input window, operand 1']
    #allocation6 [shape = 's32[2]{0}', space=sflag, size = 0x8, scoped, tag = 'scoped memory for tpu_custom_call.1']
    #allocation7 [shape = 's32[2]{0}', space=sflag, size = 0x8, scoped, tag = 'scoped memory for tpu_custom_call.1']
    #allocation8 [shape = 'u8[8192]{0}', space=vmem, size = 0x2000, scoped, tag = 'output window, operand 0']
    %7 = vsyncpa [#allocation6], 0
    %s8 = scalar_lea.sflag [#allocation6], 1
    %9 = vsyncpa %s8, 0
    %10 = vsyncpa [#allocation7], 0
    %s11 = scalar_lea.sflag [#allocation7], 1
    %12 = vsyncpa %s11, 0
    loop: start=0, step=1, limit=11
    $region2: #{tpu_custom_call.1} parent=1 // loop_pre_header
      _
    $region3: #{tpu_custom_call.1} parent=1 // loop_header
      %s14 = sphi 0, %s18
      %p15 = scmp.ge.s32.totalorder %s14, 11
      %s21 = sphi 0, %s33
      %s22 = sphi 0, %s29
      %s23 = sphi 0, %s21
      %s24 = sphi 0, %s22
      %s25 = sphi 0, %s23
      %s26 = sphi 0, %s24
      %s36 = sphi 0, %s38
      %s39 = sphi 0, %s36
      %s40 = sphi 0, %s39
      %s56 = sphi 0, %s40
      %s64 = sphi 0, %s66
      %s67 = sphi 0, %s64
      %s68 = sphi 0, %s67
      %s84 = sphi 0, %s68
      %s90 = sphi 0, %s92
      %s93 = sphi 0, %s90
      %s94 = sphi 0, %s93
      %s110 = sphi 0, %s94
    $region4: #{tpu_custom_call.1} parent=1 // loop_header_branch
      %17 = sbr.rel (%p15) target = $region8
    $region5: #{tpu_custom_call.1} parent=1 // loop_body
      %s19 = ssub.s32 %s14, 1
      %s20 = ssub.s32 %s14, 2
      %s27 = sadd.s32 1, %s22
      %p28 = scmp.ge.s32.totalorder %s27, 3
      %s29 = scalar_select %p28, 0, %s27
      %s30 = sadd.s32 1, %s21
      %s31 = scalar_select %p28, %s30, %s21
      %p32 = scmp.ge.s32.totalorder %s31, 3
      %s33 = scalar_select %p32, 0, %s31
      %s34 = ssub.s32 %s21, %s33
      %p35 = scmp.eq.s32.totalorder %s34, 0
      %s37 = sadd.s32 %s36, 1
      %s38 = scalar_select %p35, %s36, %s37
      %p41 = pneg %p35
      %p42 = scmp.eq.s32.totalorder %s14, 8
      %p43 = por %p41, %p42
      %p44 = scmp.ne.s32.totalorder %s36, %s39
      %p45 = scmp.eq.s32.totalorder %s14, 0
      %p46 = por %p44, %p45
      %p47 = scmp.ne.s32.totalorder %s36, %s39
      %p48 = scmp.eq.s32.totalorder %s19, 8
      %p49 = por %p47, %p48
      %p50 = scmp.ne.s32.totalorder %s39, %s40
      %p51 = scmp.eq.s32.totalorder %s19, 0
      %p52 = por %p50, %p51
      %p53 = scmp.ne.s32.totalorder %s39, %s40
      %p54 = scmp.eq.s32.totalorder %s20, 8
      %p55 = por %p53, %p54
      %p57 = scmp.ne.s32.totalorder %s40, %s56
      %p58 = scmp.eq.s32.totalorder %s20, 0
      %p59 = por %p57, %p58
      %s60 = ssub.s32 %s21, %s33
      %s61 = ssub.s32 %s22, %s29
      %s62 = sor.u32 %s60, %s61
      %p63 = scmp.eq.s32.totalorder %s62, 0
      %s65 = sadd.s32 %s64, 1
      %s66 = scalar_select %p63, %s64, %s65
      %p69 = pneg %p63
      %p70 = scmp.eq.s32.totalorder %s14, 8
      %p71 = por %p69, %p70
      %p72 = scmp.ne.s32.totalorder %s64, %s67
      %p73 = scmp.eq.s32.totalorder %s14, 0
      %p74 = por %p72, %p73
      %p75 = scmp.ne.s32.totalorder %s64, %s67
      %p76 = scmp.eq.s32.totalorder %s19, 8
      %p77 = por %p75, %p76
      %p78 = scmp.ne.s32.totalorder %s67, %s68
      %p79 = scmp.eq.s32.totalorder %s19, 0
      %p80 = por %p78, %p79
      %p81 = scmp.ne.s32.totalorder %s67, %s68
      %p82 = scmp.eq.s32.totalorder %s20, 8
      %p83 = por %p81, %p82
      %p85 = scmp.ne.s32.totalorder %s68, %s84
      %p86 = scmp.eq.s32.totalorder %s20, 0
      %p87 = por %p85, %p86
      %s88 = ssub.s32 %s21, %s33
      %p89 = scmp.eq.s32.totalorder %s88, 0
      %s91 = sadd.s32 %s90, 1
      %s92 = scalar_select %p89, %s90, %s91
      %p95 = pneg %p89
      %p96 = scmp.eq.s32.totalorder %s14, 8
      %p97 = por %p95, %p96
      %p98 = scmp.ne.s32.totalorder %s90, %s93
      %p99 = scmp.eq.s32.totalorder %s14, 0
      %p100 = por %p98, %p99
      %p101 = scmp.ne.s32.totalorder %s90, %s93
      %p102 = scmp.eq.s32.totalorder %s19, 8
      %p103 = por %p101, %p102
      %p104 = scmp.ne.s32.totalorder %s93, %s94
      %p105 = scmp.eq.s32.totalorder %s19, 0
      %p106 = por %p104, %p105
      %p107 = scmp.ne.s32.totalorder %s93, %s94
      %p108 = scmp.eq.s32.totalorder %s20, 8
      %p109 = por %p107, %p108
      %p111 = scmp.ne.s32.totalorder %s94, %s110
      %p112 = scmp.eq.s32.totalorder %s20, 0
      %p113 = por %p111, %p112
      %p114 = scmp.le.s32.totalorder 1, %s14
      %p115 = scmp.lt.s32.totalorder %s14, 10
      %p116 = pnand %p114, %p115
      %p117 = pneg %p116
      // Predicated region
      $region9: #{tpu_custom_call.1} parent=5 // pred_check
        _
      $region10: #{tpu_custom_call.1} parent=5 // pred_check_branch
        %119 = sbr.rel (%p116) target = $region12
      $region11: #{tpu_custom_call.1} parent=5 // pred_region
        %s120 = ssub.s32 %s14, 1
      $region12: #{tpu_custom_call.1} parent=5 // pred_fallthru
        _
      %p121 = scmp.lt.s32.totalorder %s14, 9
      // Predicated region
      $region13: #{tpu_custom_call.1} parent=5 // pred_check
        %p122 = pneg %p121
      $region14: #{tpu_custom_call.1} parent=5 // pred_check_branch
        %124 = sbr.rel (%p122) target = $region16
      $region15: #{tpu_custom_call.1} parent=5 // pred_region
        // Predicated region
        $region17: #{tpu_custom_call.1} parent=15 // pred_check
          %p125 = pneg %p46
        $region18: #{tpu_custom_call.1} parent=15 // pred_check_branch
          %127 = sbr.rel (%p125) target = $region20
        $region19: #{tpu_custom_call.1} parent=15 // pred_region
          %p128 = scmp.lt.s32.totalorder %s21, 2
          %s129 = scalar_select %p128, %s21, 2
          %s130 = smul.addr %s129, 8
          %s131 = scalar_lea.vmem %s0, %s130
        $region20: #{tpu_custom_call.1} parent=15 // pred_fallthru
          _
        // Predicated region
        $region21: #{tpu_custom_call.1} parent=15 // pred_check
          %p132 = pneg %p74
        $region22: #{tpu_custom_call.1} parent=15 // pred_check_branch
          %134 = sbr.rel (%p132) target = $region24
        $region23: #{tpu_custom_call.1} parent=15 // pred_region
          %s135 = sand.u32 %s64, 1
          %s136 = scalar_lea.sflag [#allocation6], %s135
          %s137 = sand.u32 %s64, 1
          %s138 = smul.addr %s137, 8
          %s139 = scalar_lea.vmem [#allocation5], %s138
          %s141 = ssub.s32 128, 128
          %142 = vsyncadd %s136, %s141
          %s143 = smul.addr %s21, 3
          %s144 = sadd.s32 %s22, %s143
          %s145 = smul.addr %s144, 128
          %s146 = scalar_lea.hbm %s1, %s145
          %s148 = sshll.u32 %s139, 4
          %s149 = int_to_ptr.vmem [resolvable:$true] %s148
          %151 = dma.hbm_to_vmem [thread:$0]  %s146, 128, %s149, %s136
        $region24: #{tpu_custom_call.1} parent=15 // pred_fallthru
          _
      $region16: #{tpu_custom_call.1} parent=5 // pred_fallthru
        _
      %p152 = scmp.le.s32.totalorder 1, %s14
      %p153 = scmp.lt.s32.totalorder %s14, 10
      %p154 = pnand %p152, %p153
      %p155 = pneg %p154
      // Predicated region
      $region25: #{tpu_custom_call.1} parent=5 // pred_check
        _
      $region26: #{tpu_custom_call.1} parent=5 // pred_check_branch
        %157 = sbr.rel (%p154) target = $region28
      $region27: #{tpu_custom_call.1} parent=5 // pred_region
        %s158 = ssub.s32 %s14, 1
        %s159 = sand.u32 %s67, 1
        %s160 = scalar_lea.sflag [#allocation6], %s159
        %s161 = sand.u32 %s67, 1
        %s162 = smul.addr %s161, 8
        %s163 = scalar_lea.vmem [#allocation5], %s162
        // Predicated region
        $region29: #{tpu_custom_call.1} parent=27 // pred_check
          %p164 = pneg %p80
        $region30: #{tpu_custom_call.1} parent=27 // pred_check_branch
          %166 = sbr.rel (%p164) target = $region32
        $region31: #{tpu_custom_call.1} parent=27 // pred_region
          %167 = dma.done %s160, 128
        $region32: #{tpu_custom_call.1} parent=27 // pred_fallthru
          _
        %p168 = scmp.lt.s32.totalorder %s23, 2
        %s169 = scalar_select %p168, %s23, 2
        %s170 = smul.addr %s169, 8
        %s171 = scalar_lea.vmem %s0, %s170
        %p172 = pneg %p52
        %p173 = pneg %p49
        %s174 = sand.u32 %s67, 1
        %s175 = scalar_lea.sflag [#allocation6], %s174
        %s176 = sand.u32 %s67, 1
        %s177 = smul.addr %s176, 8
        %s178 = scalar_lea.vmem [#allocation5], %s177
        %p179 = pneg %p80
        %p180 = pneg %p77
        %p181 = pneg %p106
        %p182 = pneg %p103
        %s183 = sand.u32 %s93, 1
        %s184 = scalar_lea.sflag [#allocation7], %s183
        %s185 = sand.u32 %s93, 1
        %s186 = smul.addr %s185, 8
        %s187 = scalar_lea.vmem [#allocation8], %s186
        %p188 = scmp.lt.s32.totalorder %s23, 2
        %s189 = scalar_select %p188, %s23, 2
        %s190 = smul.addr %s189, 8
        %s191 = scalar_lea.vmem %s0, %s190
        %p192 = scmp.eq.s32.totalorder %s24, 0
        // Predicated region
        $region33: #{tpu_custom_call.1} parent=27 // pred_check
          %p193 = pneg %p192
        $region34: #{tpu_custom_call.1} parent=27 // pred_check_branch
          %195 = sbr.rel (%p193) target = $region36
        $region35: #{tpu_custom_call.1} parent=27 // pred_region
          %vm196 = vcmask 7168
          %197 = vst.msk [vmem:[#allocation2] sm:$0xff] %vm196, -inf
          %198 = vst.msk [vmem:[#allocation3] sm:$0xff] %vm196, 0.0
          %199 = vst.msk [vmem:[#allocation4] sm:$0xff] %vm196, 0.0
        $region36: #{tpu_custom_call.1} parent=27 // pred_fallthru
          _
        %v200 = vld [vmem:[%s163] sm:$0xff]
        %v201 = vld [vmem:[%s191] sm:$0xff]
        %v202 = vlaneseq
        %v203 = vand.u32 %v202, 127
        %s204 = smul.u32 %s24, 128
        %v205 = vstv %s204
        %v206 = vadd.s32 %v203, %v205
        %vm207 = vcmp.lt.s32.totalorder %v206, 320
        %v208 = vsel %vm207, %v200, -inf
        %v209 = vld [vmem:[#allocation2] sm:$0xff]
        %210 = vmax.xlane.f32.xlu0 %v208
        %v211 = vpop.xlane.xlu0 %210
        %v212 = vmax.f32 %v209, %v211
        %vm213 = vcmp.eq.f32.partialorder %v209, -inf
        %v214 = vsub.f32 %v209, %v212
        %v215 = vmul.f32 %v214, 1.442695
        %v216 = vpow.pop %v215
        %v217 = vsel %vm213, 0.0, %v216
        %219 = vset.pattern.permute.xlu0 0
        %220 = vperm.xlu0 %219, %v212
        %v221 = vpop.permute.xlu0 %220
        %v223 = vsub.f32 %v208, %v221
        %v224 = vmul.f32 %v223, 1.442695
        %v225 = vpow.pop %v224
        %v226 = vld [vmem:[#allocation3] sm:$0xff]
        %v227 = vmul.f32 %v217, %v226
        %228 = vadd.xlane.f32.xlu0 %v225
        %v229 = vpop.xlane.xlu0 %228
        %v230 = vadd.f32 %v227, %v229
        %vm231 = vcmask 7168
        %232 = vst.msk [vmem:[#allocation3] sm:$0xff] %vm231, %v230
        %233 = vst.msk [vmem:[#allocation2] sm:$0xff] %vm231, %v212
        %234 = vset.pattern.permute.xlu0 0
        %235 = vperm.xlu0 %234, %v201
        %v236 = vpop.permute.xlu0 %235
        %vm237 = vcmp.eq.s32.totalorder %v206, %v236
        %vm238 = vmand %vm237, %vm207
        %v239 = vld [vmem:[#allocation4] sm:$0xff]
        %v240 = vsel %vm238, %v200, 0.0
        %241 = vadd.xlane.f32.xlu0 %v240
        %v242 = vpop.xlane.xlu0 %241
        %v243 = vadd.f32 %v239, %v242
        %244 = vst.msk [vmem:[#allocation4] sm:$0xff] %vm231, %v243
        %p245 = scmp.eq.s32.totalorder %s24, 2
        // Predicated region
        $region37: #{tpu_custom_call.1} parent=27 // pred_check
          %p246 = pneg %p245
        $region38: #{tpu_custom_call.1} parent=27 // pred_check_branch
          %248 = sbr.rel (%p246) target = $region40
        $region39: #{tpu_custom_call.1} parent=27 // pred_region
          %v249 = vld [vmem:[#allocation2] sm:$0xff]
          %v250 = vld [vmem:[#allocation3] sm:$0xff]
          %v251 = vlog2.pop %v250
          %v252 = vmul.f32 %v251, 0.6931472
          %v253 = vadd.f32 %v249, %v252
          %v254 = vld [vmem:[#allocation4] sm:$0xff]
          %v255 = vsub.f32 %v253, %v254
          %v256 = vlaneseq
          %v257 = vshrl.u32 %v256, 7
          %s258 = smul.u32 %s23, 8
          %v259 = vstv %s258
          %v260 = vadd.s32 %v257, %v259
          %vm261 = vcmp.lt.s32.totalorder %v260, 20
          %v262 = vsel %vm261, %v255, 0.0
          %v263 = vsel %vm231, %v262, 0.0
          %264 = vadd.xlane.f32.xlu0 %v263
          %v265 = vpop.xlane.xlu0 %264
          %v266 = vrot.slane %v265, 4
          %v267 = vadd.f32 %v265, %v266
          %v268 = vrot.slane %v267, 2
          %v269 = vadd.f32 %v267, %v268
          %v270 = vrot.slane %v269, 1
          %v271 = vadd.f32 %v269, %v270
          %s272 = vtos %v271
          %v273 = vstv %s272
          %274 = vst [vmem:[%s187] sm:$0xff] %v273
        $region40: #{tpu_custom_call.1} parent=27 // pred_fallthru
          _
        %s275 = sand.u32 %s93, 1
        %s276 = scalar_lea.sflag [#allocation7], %s275
        %s277 = sand.u32 %s93, 1
        %s278 = smul.addr %s277, 8
        %s279 = scalar_lea.vmem [#allocation8], %s278
        // Predicated region
        $region41: #{tpu_custom_call.1} parent=27 // pred_check
          %p280 = pneg %p103
        $region42: #{tpu_custom_call.1} parent=27 // pred_check_branch
          %282 = sbr.rel (%p280) target = $region44
        $region43: #{tpu_custom_call.1} parent=27 // pred_region
          %s284 = ssub.s32 128, 128
          %285 = vsyncadd %s276, %s284
          %s286 = smul.addr %s23, 128
          %s287 = scalar_lea.hbm %s2, %s286
          %s289 = sshll.u32 %s279, 4
          %s290 = int_to_ptr.vmem [resolvable:$true] %s289
          %292 = dma.vmem_to_hbm [thread:$0]  %s290, 128, %s287, %s276
        $region44: #{tpu_custom_call.1} parent=27 // pred_fallthru
          _
      $region28: #{tpu_custom_call.1} parent=5 // pred_fallthru
        _
      %p293 = scmp.le.s32.totalorder 2, %s14
      // Predicated region
      $region45: #{tpu_custom_call.1} parent=5 // pred_check
        %p294 = pneg %p293
      $region46: #{tpu_custom_call.1} parent=5 // pred_check_branch
        %296 = sbr.rel (%p294) target = $region48
      $region47: #{tpu_custom_call.1} parent=5 // pred_region
        %s297 = ssub.s32 %s14, 2
        // Predicated region
        $region49: #{tpu_custom_call.1} parent=47 // pred_check
          %p298 = pneg %p109
        $region50: #{tpu_custom_call.1} parent=47 // pred_check_branch
          %300 = sbr.rel (%p298) target = $region52
        $region51: #{tpu_custom_call.1} parent=47 // pred_region
          %s301 = sand.u32 %s94, 1
          %s302 = scalar_lea.sflag [#allocation7], %s301
          %s303 = sand.u32 %s94, 1
          %s304 = smul.addr %s303, 8
          %s305 = scalar_lea.vmem [#allocation8], %s304
          %306 = dma.done %s302, 128
        $region52: #{tpu_custom_call.1} parent=47 // pred_fallthru
          _
      $region48: #{tpu_custom_call.1} parent=5 // pred_fallthru
        _
    $region6: #{tpu_custom_call.1} parent=1 // loop_footer
      %s18 = sadd.s32 1, %s14
    $region7: #{tpu_custom_call.1} parent=1 // loop_footer_branch
      %13 = sbr.rel target = $region3
    $region8: #{tpu_custom_call.1} parent=1 // loop_exit
      _
    %307 = vsyncpa [#allocation6], 1
    %s308 = scalar_lea.sflag [#allocation6], 1
    %309 = vsyncpa %s308, 1
    %310 = vsyncpa [#allocation7], 1
    %s311 = scalar_lea.sflag [#allocation7], 1
    %312 = vsyncpa %s311, 1

</llo_original>
